<compile_context>
chip_gen: v7x
topology: tpu7x:2x2x1
jax: 0.10.0
libtpu: 0.0.40
codegen_flags: <defaults>
</compile_context>

<pallas_src>
import functools
import math

import jax
import jax.numpy as jnp
from jax.experimental import pallas as pl
from jax.experimental.pallas import tpu as pltpu


# -----------------------------------------------------------------------------
# In-kernel counter-based hash (uint32 -> uint32), VPU-only, interpret-safe.
# -----------------------------------------------------------------------------
def _fmix32(x):
    x = x ^ (x >> 16)
    x = x * jnp.uint32(0x7FEB352D)
    x = x ^ (x >> 15)
    x = x * jnp.uint32(0x846CA68B)
    x = x ^ (x >> 16)
    return x


# -----------------------------------------------------------------------------
# Kernels
# -----------------------------------------------------------------------------
def _add_pe_kernel(x_ref, pe_ref, o_ref, *, nbatch, emb):
    # x_ref/o_ref: (TS, B*E) dense 2-D tiles; pe_ref: (TS, E).
    pe = pe_ref[...]
    for b in range(nbatch):                       # static, small B -> unrolled
        sl = slice(b * emb, (b + 1) * emb)        # 128-aligned lane slice
        o_ref[:, sl] = x_ref[:, sl] + pe


def _add_pe_dropout_kernel(seed_ref, x_ref, pe_ref, o_ref, *, nbatch, emb, rate):
    # Training mode: dropout fused with the positional add (single HBM pass).
    rows, cols = x_ref.shape
    i = pl.program_id(0)

    # Global element index (tile-size invariant) -> hash -> keep mask.
    row = jax.lax.broadcasted_iota(jnp.int32, (rows, cols), 0).astype(jnp.uint32)
    col = jax.lax.broadcasted_iota(jnp.int32, (rows, cols), 1).astype(jnp.uint32)
    gidx = (i.astype(jnp.uint32) * jnp.uint32(rows) + row) * jnp.uint32(cols) + col
    seed = seed_ref[0].astype(jnp.uint32) * jnp.uint32(0x9E3779B9)  # decorrelate nearby seeds
    h = _fmix32(gidx ^ seed)
    r24 = (h >> 8).astype(jnp.int32)              # 24 uniform bits, non-negative
    threshold = jnp.int32(int(rate * float(1 << 24)))
    keep = r24 >= threshold                       # P(drop) == rate
    scale = 1.0 / (1.0 - rate)

    pe = pe_ref[...]
    for b in range(nbatch):
        sl = slice(b * emb, (b + 1) * emb)
        y = x_ref[:, sl] + pe
        o_ref[:, sl] = jnp.where(keep[:, sl], y * scale, 0.0).astype(o_ref.dtype)


# -----------------------------------------------------------------------------
# Wrapper
# -----------------------------------------------------------------------------
def _pick_seq_tile(S, row_bytes, target_bytes=4 * 1024 * 1024):
    """Rows per tile so one dense (S, B*E) x-tile is ~target_bytes."""
    rows = max(1, target_bytes // max(1, row_bytes))
    if rows >= 8:
        rows = (rows // 8) * 8                    # keep (8,128) divisibility
    rows = min(S, rows)
    if rows < S and rows % 8 != 0:                # partial tiles must stay 8-aligned
        rows = min(S, 8)
    return int(rows)


def positional_encoding_forward(x, pos_embedding, *, dropout_rate=0.0,
                                training=False, seed=0, seq_tile=None):
    """x: (S, B, E); pos_embedding: (maxlen, 1, E) with maxlen >= S."""
    S, B, E = x.shape
    maxlen = pos_embedding.shape[0]
    if pos_embedding.dtype != x.dtype:
        pos_embedding = pos_embedding.astype(x.dtype)

    # Dense 2-D views (free, row-major contiguous): no sublane padding at small B.
    x2 = x.reshape(S, B * E)
    pe2 = pos_embedding.reshape(maxlen, E)

    itemsize = jnp.dtype(x.dtype).itemsize
    TS = seq_tile if seq_tile is not None else _pick_seq_tile(S, B * E * itemsize)
    grid = (pl.cdiv(S, TS),)

    # VMEM budget from the *actual* (dense) tile bytes: 2x(x+out) + 2x pe
    # double buffers plus headroom.  Stays well inside v7x's 64 MiB-per-TC VMEM
    # and is trivially fine on v5e/v6e's 128 MiB.
    x_tile_bytes = TS * B * E * itemsize
    pe_tile_bytes = TS * E * itemsize
    vmem_limit = int(max(32 * 1024 * 1024,
                         min(48 * 1024 * 1024,
                             4 * x_tile_bytes + 2 * pe_tile_bytes + (4 << 20))))

    compiler_params = pltpu.CompilerParams(
        dimension_semantics=("parallel",),        # independent tiles: v7x 2-TC shard
        vmem_limit_bytes=vmem_limit,
    )
    out_shape = jax.ShapeDtypeStruct((S, B * E), x.dtype)

    if not training or dropout_rate == 0.0:
        out2 = pl.pallas_call(
            functools.partial(_add_pe_kernel, nbatch=B, emb=E),
            out_shape=out_shape,
            grid_spec=pltpu.PrefetchScalarGridSpec(
                num_scalar_prefetch=0,
                grid=grid,
                in_specs=[
                    pl.BlockSpec((TS, B * E), lambda i: (i, 0)),
                    # Row block taken directly from the full (maxlen, E) table.
                    pl.BlockSpec((TS, E), lambda i: (i, 0)),
                ],
                out_specs=pl.BlockSpec((TS, B * E), lambda i: (i, 0)),
            ),
            input_output_aliases={0: 0},          # in-place on x's buffer
            compiler_params=compiler_params,
        )(x2, pe2)
    else:
        if dropout_rate >= 1.0:
            return jnp.zeros_like(x)
        seeds = jnp.asarray([seed], dtype=jnp.int32)
        out2 = pl.pallas_call(
            functools.partial(_add_pe_dropout_kernel, nbatch=B, emb=E,
                              rate=float(dropout_rate)),
            out_shape=out_shape,
            grid_spec=pltpu.PrefetchScalarGridSpec(
                num_scalar_prefetch=1,            # seed lands in SMEM
                grid=grid,
                in_specs=[
                    pl.BlockSpec((TS, B * E), lambda i, s: (i, 0)),
                    pl.BlockSpec((TS, E), lambda i, s: (i, 0)),
                ],
                out_specs=pl.BlockSpec((TS, B * E), lambda i, s: (i, 0)),
            ),
            input_output_aliases={1: 0},          # x is input index 1 after the seed
            compiler_params=compiler_params,
        )(seeds, x2, pe2)

    return out2.reshape(S, B, E)


# -----------------------------------------------------------------------------
# Deterministic parameter setup (mirrors the PyTorch __init__)
# -----------------------------------------------------------------------------
def make_pos_embedding(emb_size, maxlen=5000, dtype=jnp.float32):
    den = jnp.exp(-jnp.arange(0, emb_size, 2, dtype=jnp.float32)
                  * math.log(10000.0) / emb_size)                 # (ceil(E/2),)
    pos = jnp.arange(0, maxlen, dtype=jnp.float32).reshape(maxlen, 1)
    angles = pos * den                                            # (maxlen, ceil(E/2))
    pe = jnp.zeros((maxlen, emb_size), dtype=jnp.float32)
    pe = pe.at[:, 0::2].set(jnp.sin(angles))
    pe = pe.at[:, 1::2].set(jnp.cos(angles[:, : emb_size // 2]))  # odd-E safe
    return pe[:, None, :].astype(dtype)                           # (maxlen, 1, E)


# -----------------------------------------------------------------------------
# Main
# -----------------------------------------------------------------------------
if __name__ == "__main__":
    # Demo shapes: small, with E a multiple of 128 so every slice/store is lane-dense.
    SEQ, BATCH, EMB = 8, 2, 128
    MAXLEN = 64
    DROPOUT = 0.1

    key = jax.random.PRNGKey(0)
    x = jax.random.normal(key, (SEQ, BATCH, EMB), dtype=jnp.float32)
    pos_embedding = make_pos_embedding(EMB, maxlen=MAXLEN)

    # Reference (eval-mode dropout == identity), computed from the original x.
    ref = x + pos_embedding[:SEQ]

    # --- Training-mode path: fused dropout in the same kernel ----------------
    out_drop = jax.block_until_ready(
        positional_encoding_forward(x, pos_embedding, dropout_rate=DROPOUT,
                                    training=True, seed=1234))
    keep_scale = 1.0 / (1.0 - DROPOUT)
    is_zero = jnp.isclose(out_drop, 0.0, atol=1e-6)
    is_kept = jnp.isclose(out_drop, ref * keep_scale, atol=1e-4, rtol=1e-4)
    assert out_drop.shape == (SEQ, BATCH, EMB)
    assert bool(jnp.all(is_zero | is_kept))
    drop_frac = float(jnp.mean(is_zero.astype(jnp.float32)))
    assert 0.02 <= drop_frac <= 0.30, drop_frac    # loose sanity check on the mask

    # --- Eval-mode path (aliased, in-place add) -------------------------------
    out = jax.block_until_ready(positional_encoding_forward(x, pos_embedding))
    assert out.shape == (SEQ, BATCH, EMB)
    assert jnp.allclose(out, ref, atol=1e-6, rtol=1e-6)

    # --- Tiled path (grid > 1) at a modest size to exercise the pipeline ------
    S2, B2, E2, TS2 = 512, 4, 256, 128
    x2 = jax.random.normal(jax.random.PRNGKey(1), (S2, B2, E2), dtype=jnp.float32)
    pe2 = make_pos_embedding(E2, maxlen=1024)
    ref2 = x2 + pe2[:S2]
    out2 = jax.block_until_ready(
        positional_encoding_forward(x2, pe2, seq_tile=TS2))
    assert jnp.allclose(out2, ref2, atol=1e-6, rtol=1e-6)

    print("KERNEL_OK")
</pallas_src>

<mosaic_0001>
module attributes {stable_mosaic.version = 11 : i64} {
  func.func @_add_pe_dropout_kernel(%arg0: i32, %arg1: memref<1xi32, #tpu.memory_space<smem>>, %arg2: memref<8x256xf32, #tpu.memory_space<vmem>>, %arg3: memref<8x128xf32, #tpu.memory_space<vmem>>, %arg4: memref<8x256xf32, #tpu.memory_space<vmem>>) attributes {dimension_semantics = [#tpu.dimension_semantics<parallel>], iteration_bounds = array<i64: 1>, scalar_prefetch = 1 : i64, scratch_operands = 0 : i64, tpu.core_type = #tpu.core_type<tc>, window_params = [{transform_indices = @transform_0, window_bounds = array<i64: 8, 256>}, {transform_indices = @transform_1, window_bounds = array<i64: 8, 128>}, {transform_indices = @transform_2, window_bounds = array<i64: 8, 256>}]} {
    %0 = tpu.iota {dimensions = array<i32: 0>} : vector<8x256xi32>
    %1 = tpu.iota {dimensions = array<i32: 1>} : vector<8x256xi32>
    %c8_i32 = arith.constant 8 : i32
    %2 = arith.muli %arg0, %c8_i32 : i32
    %3 = vector.broadcast %2 : i32 to vector<8x256xi32>
    %4 = arith.addi %3, %0 : vector<8x256xi32>
    %c256_i32 = arith.constant 256 : i32
    %5 = vector.broadcast %c256_i32 : i32 to vector<8x256xi32>
    %6 = arith.muli %4, %5 : vector<8x256xi32>
    %7 = arith.addi %6, %1 : vector<8x256xi32>
    %c0 = arith.constant 0 : index
    %8 = memref.load %arg1[%c0] : memref<1xi32, #tpu.memory_space<smem>>
    %c-1640531527_i32 = arith.constant -1640531527 : i32
    %9 = arith.muli %8, %c-1640531527_i32 : i32
    %10 = vector.broadcast %9 : i32 to vector<8x256xi32>
    %11 = arith.xori %7, %10 : vector<8x256xi32>
    %c16_i32 = arith.constant 16 : i32
    %12 = vector.broadcast %c16_i32 : i32 to vector<8x256xi32>
    %13 = arith.shrui %11, %12 : vector<8x256xi32>
    %14 = arith.xori %11, %13 : vector<8x256xi32>
    %c2146121005_i32 = arith.constant 2146121005 : i32
    %15 = vector.broadcast %c2146121005_i32 : i32 to vector<8x256xi32>
    %16 = arith.muli %14, %15 : vector<8x256xi32>
    %c15_i32 = arith.constant 15 : i32
    %17 = vector.broadcast %c15_i32 : i32 to vector<8x256xi32>
    %18 = arith.shrui %16, %17 : vector<8x256xi32>
    %19 = arith.xori %16, %18 : vector<8x256xi32>
    %c-2073254261_i32 = arith.constant -2073254261 : i32
    %20 = vector.broadcast %c-2073254261_i32 : i32 to vector<8x256xi32>
    %21 = arith.muli %19, %20 : vector<8x256xi32>
    %c16_i32_0 = arith.constant 16 : i32
    %22 = vector.broadcast %c16_i32_0 : i32 to vector<8x256xi32>
    %23 = arith.shrui %21, %22 : vector<8x256xi32>
    %24 = arith.xori %21, %23 : vector<8x256xi32>
    %c8_i32_1 = arith.constant 8 : i32
    %25 = vector.broadcast %c8_i32_1 : i32 to vector<8x256xi32>
    %26 = arith.shrui %24, %25 : vector<8x256xi32>
    %c1677721_i32 = arith.constant 1677721 : i32
    %27 = vector.broadcast %c1677721_i32 : i32 to vector<8x256xi32>
    %28 = arith.cmpi sge, %26, %27 : vector<8x256xi32>
    %c0_2 = arith.constant 0 : index
    %c0_3 = arith.constant 0 : index
    %29 = vector.load %arg3[%c0_2, %c0_3] : memref<8x128xf32, #tpu.memory_space<vmem>>, vector<8x128xf32>
    %c0_4 = arith.constant 0 : index
    %c0_5 = arith.constant 0 : index
    %30 = vector.load %arg2[%c0_4, %c0_5] : memref<8x256xf32, #tpu.memory_space<vmem>>, vector<8x128xf32>
    %31 = arith.addf %30, %29 : vector<8x128xf32>
    %32 = vector.extract_strided_slice %28 {offsets = [0, 0], sizes = [8, 128], strides = [1, 1]} : vector<8x256xi1> to vector<8x128xi1>
    %cst = arith.constant 1.11111116 : f32
    %33 = vector.broadcast %cst : f32 to vector<8x128xf32>
    %34 = arith.mulf %31, %33 : vector<8x128xf32>
    %cst_6 = arith.constant 0.000000e+00 : f32
    %35 = vector.broadcast %cst_6 : f32 to vector<8x128xf32>
    %36 = arith.select %32, %34, %35 : vector<8x128xi1>, vector<8x128xf32>
    %c0_7 = arith.constant 0 : index
    %c0_8 = arith.constant 0 : index
    %37 = vector.load %arg4[%c0_7, %c0_8] : memref<8x256xf32, #tpu.memory_space<vmem>>, vector<8x128xf32>
    tpu.vector_store %arg4[%c0_7, %c0_8], %36 {strides = array<i32>} : memref<8x256xf32, #tpu.memory_space<vmem>>, vector<8x128xf32>,
    %c0_9 = arith.constant 0 : index
    %c128 = arith.constant 128 : index
    %38 = vector.load %arg2[%c0_9, %c128] : memref<8x256xf32, #tpu.memory_space<vmem>>, vector<8x128xf32>
    %39 = arith.addf %38, %29 : vector<8x128xf32>
    %40 = vector.extract_strided_slice %28 {offsets = [0, 128], sizes = [8, 128], strides = [1, 1]} : vector<8x256xi1> to vector<8x128xi1>
    %cst_10 = arith.constant 1.11111116 : f32
    %41 = vector.broadcast %cst_10 : f32 to vector<8x128xf32>
    %42 = arith.mulf %39, %41 : vector<8x128xf32>
    %cst_11 = arith.constant 0.000000e+00 : f32
    %43 = vector.broadcast %cst_11 : f32 to vector<8x128xf32>
    %44 = arith.select %40, %42, %43 : vector<8x128xi1>, vector<8x128xf32>
    %c0_12 = arith.constant 0 : index
    %c128_13 = arith.constant 128 : index
    %45 = vector.load %arg4[%c0_12, %c128_13] : memref<8x256xf32, #tpu.memory_space<vmem>>, vector<8x128xf32>
    tpu.vector_store %arg4[%c0_12, %c128_13], %44 {strides = array<i32>} : memref<8x256xf32, #tpu.memory_space<vmem>>, vector<8x128xf32>,
    return
  }
  func.func @transform_0(%arg0: i32, %arg1: memref<1xi32, #tpu.memory_space<smem>>) -> (i32, i32) {
    %c0_i32 = arith.constant 0 : i32
    %c0_i32_0 = arith.constant 0 : i32
    return %arg0, %c0_i32 : i32, i32
  }
  func.func @transform_1(%arg0: i32, %arg1: memref<1xi32, #tpu.memory_space<smem>>) -> (i32, i32) {
    %c0_i32 = arith.constant 0 : i32
    %c0_i32_0 = arith.constant 0 : i32
    return %arg0, %c0_i32 : i32, i32
  }
  func.func @transform_2(%arg0: i32, %arg1: memref<1xi32, #tpu.memory_space<smem>>) -> (i32, i32) {
    %c0_i32 = arith.constant 0 : i32
    %c0_i32_0 = arith.constant 0 : i32
    return %arg0, %c0_i32 : i32, i32
  }
}

</mosaic_0001>

<llo_original>
// kernel: tpu_custom_call.1
$region0: #{tpu_custom_call.1}
  #allocation0 [shape = 'u32[]', space=smem, size = 0x4, offset = 0x4, fixed_abs, tag = 'smem constant byte address 0x4 - core index']
  #allocation1 [shape = 'u32[144,128]{1,0:T(1,128)}', space=vmem, size = 0x12000, scoped, tag = 'internal scratch']
  #allocation2 [shape = 's32[1]{0}', space=sflag, size = 0x4, scoped, tag = 'scoped memory for tpu_custom_call.1']
  #allocation3 [shape = 's32[1]{0:T(128)S(6)}', space=smem, size = 0x200, scoped, tag = 'prefetched SMEM operand 0']
  %s0 = inlined_call_operand.<no memory space> [shape: s32[1], index: 0, kind: input, shape index: {}]
  %s1 = inlined_call_operand.hbm [shape: f32[8,256], index: 1, kind: input, shape index: {}, may-alias: {1,3}]
  %s2 = inlined_call_operand.hbm [shape: f32[64,128], index: 2, kind: input, shape index: {}]
  %s3 = inlined_call_operand.hbm [shape: f32[8,256], index: 3, kind: output, shape index: {}, may-alias: {1,3}]
  %s4 = sld [smem:[#allocation0]]
  $region26: #{tpu_custom_call.1} parent=0
    _
  %s6 = ssub.s32 1, %s4
  %s7 = scalar_select 0, %s6, %s4
  %8 = sst [smem:[#allocation3]] %s0
  $region1: #{tpu_custom_call.1} parent=0
    #allocation4 [shape = 'u8[8192]{0}', space=vmem, size = 0x2000, scoped, tag = 'input window, operand 1, single buffered']
    #allocation5 [shape = 's32[1]{0}', space=sflag, size = 0x4, scoped, tag = 'scoped memory for tpu_custom_call.1']
    #allocation6 [shape = 's32[1]{0}', space=sflag, size = 0x4, scoped, tag = 'scoped memory for tpu_custom_call.1']
    #allocation7 [shape = 'u8[4096]{0}', space=vmem, size = 0x1000, scoped, tag = 'input window, operand 2, single buffered']
    #allocation8 [shape = 's32[1]{0}', space=sflag, size = 0x4, scoped, tag = 'scoped memory for tpu_custom_call.1']
    #allocation9 [shape = 'u8[8192]{0}', space=vmem, size = 0x2000, scoped, tag = 'output window, operand 0, single buffered']
    %9 = vsyncpa [#allocation5], 0
    %10 = vsyncpa [#allocation8], 0
    %11 = vsyncpa [#allocation6], 0
    // Predicated region
    $region2: #{tpu_custom_call.1} parent=1 // pred_check
      _
    $region3: #{tpu_custom_call.1} parent=1 // pred_check_branch
      %13 = sbr.rel (0) target = $region5
    $region4: #{tpu_custom_call.1} parent=1 // pred_region
      %s15 = ssub.s32 256, 256
      %16 = vsyncadd [#allocation5], %s15
      %s18 = sshll.u32 [#allocation4], 4
      %s19 = int_to_ptr.vmem [resolvable:$true] %s18
      %21 = dma.hbm_to_vmem [thread:$0]  %s1, 256, %s19, [#allocation5]
    $region5: #{tpu_custom_call.1} parent=1 // pred_fallthru
      _
    // Predicated region
    $region6: #{tpu_custom_call.1} parent=1 // pred_check
      _
    $region7: #{tpu_custom_call.1} parent=1 // pred_check_branch
      %23 = sbr.rel (0) target = $region9
    $region8: #{tpu_custom_call.1} parent=1 // pred_region
      %s25 = ssub.s32 128, 128
      %26 = vsyncadd [#allocation8], %s25
      %s28 = sshll.u32 [#allocation7], 4
      %s29 = int_to_ptr.vmem [resolvable:$true] %s28
      %31 = dma.hbm_to_vmem [thread:$0]  %s2, 128, %s29, [#allocation8]
    $region9: #{tpu_custom_call.1} parent=1 // pred_fallthru
      _
    // Predicated region
    $region10: #{tpu_custom_call.1} parent=1 // pred_check
      _
    $region11: #{tpu_custom_call.1} parent=1 // pred_check_branch
      %33 = sbr.rel (0) target = $region13
    $region12: #{tpu_custom_call.1} parent=1 // pred_region
      %34 = dma.done [#allocation5], 256
    $region13: #{tpu_custom_call.1} parent=1 // pred_fallthru
      _
    // Predicated region
    $region14: #{tpu_custom_call.1} parent=1 // pred_check
      _
    $region15: #{tpu_custom_call.1} parent=1 // pred_check_branch
      %36 = sbr.rel (0) target = $region17
    $region16: #{tpu_custom_call.1} parent=1 // pred_region
      %37 = dma.done [#allocation8], 128
    $region17: #{tpu_custom_call.1} parent=1 // pred_fallthru
      _
    %v38 = vlaneseq
    %v39 = vshrl.u32 %v38, 7
    %v40 = vlaneseq
    %v41 = vand.u32 %v40, 127
    %v42 = vadd.s32 %v41, 128
    %s43 = smul.u32 0, 8
    %v44 = vstv %s43
    %v45 = vadd.s32 %v44, %v39
    %v46 = vmul.u32 %v45, 256
    %v47 = vadd.s32 %v46, %v41
    %v48 = vadd.s32 %v46, %v42
    %s49 = sld [smem:[#allocation3]]
    %s50 = smul.u32 %s49, 2654435769
    %v51 = vstv %s50
    %v52 = vxor.u32 %v47, %v51
    %v53 = vxor.u32 %v48, %v51
    %v54 = vshrl.u32 %v52, 16
    %v55 = vshrl.u32 %v53, 16
    %v56 = vxor.u32 %v52, %v54
    %v57 = vxor.u32 %v53, %v55
    %v58 = vmul.u32 %v56, 2146121005
    %v59 = vmul.u32 %v57, 2146121005
    %v60 = vshrl.u32 %v58, 15
    %v61 = vshrl.u32 %v59, 15
    %v62 = vxor.u32 %v58, %v60
    %v63 = vxor.u32 %v59, %v61
    %v64 = vmul.u32 %v62, 2221713035
    %v65 = vmul.u32 %v63, 2221713035
    %v66 = vshrl.u32 %v64, 16
    %v67 = vshrl.u32 %v65, 16
    %v68 = vxor.u32 %v64, %v66
    %v69 = vxor.u32 %v65, %v67
    %v70 = vshrl.u32 %v68, 8
    %v71 = vshrl.u32 %v69, 8
    %vm72 = vcmp.ge.s32.totalorder %v70, 1677721
    %vm73 = vcmp.ge.s32.totalorder %v71, 1677721
    %v74 = vld [vmem:[#allocation7] sm:$0xff]
    %v75 = vld [vmem:[#allocation4] sm:$0xff]
    %v76 = vadd.f32 %v75, %v74
    %v77 = vmul.f32 %v76, 1.1111112
    %v78 = vsel %vm72, %v77, 0.0
    %79 = vst [vmem:[#allocation9] sm:$0xff] %v78
    %v80 = vld [vmem:[#allocation4 + $0x8] sm:$0xff]
    %v81 = vadd.f32 %v80, %v74
    %v82 = vmul.f32 %v81, 1.1111112
    %v83 = vsel %vm73, %v82, 0.0
    %84 = vst [vmem:[#allocation9 + $0x8] sm:$0xff] %v83
    // Predicated region
    $region18: #{tpu_custom_call.1} parent=1 // pred_check
      _
    $region19: #{tpu_custom_call.1} parent=1 // pred_check_branch
      %86 = sbr.rel (0) target = $region21
    $region20: #{tpu_custom_call.1} parent=1 // pred_region
      %s88 = ssub.s32 256, 256
      %89 = vsyncadd [#allocation6], %s88
      %s91 = sshll.u32 [#allocation9], 4
      %s92 = int_to_ptr.vmem [resolvable:$true] %s91
      %94 = dma.vmem_to_hbm [thread:$0]  %s92, 256, %s3, [#allocation6]
    $region21: #{tpu_custom_call.1} parent=1 // pred_fallthru
      _
    // Predicated region
    $region22: #{tpu_custom_call.1} parent=1 // pred_check
      _
    $region23: #{tpu_custom_call.1} parent=1 // pred_check_branch
      %96 = sbr.rel (0) target = $region25
    $region24: #{tpu_custom_call.1} parent=1 // pred_region
      %97 = dma.done [#allocation6], 256
    $region25: #{tpu_custom_call.1} parent=1 // pred_fallthru
      _
    %98 = vsyncpa [#allocation5], 1
    %99 = vsyncpa [#allocation8], 1
    %100 = vsyncpa [#allocation6], 1

</llo_original>
